<compile_context>
chip_gen: v6e
topology: v6e:2x2x1
jax: 0.10.0
libtpu: 0.0.40
codegen_flags: <defaults>
</compile_context>

<pallas_src>
import jax
import jax.numpy as jnp
from jax.experimental import pallas as pl
from jax.experimental.pallas import tpu as pltpu

LANE = 128   # vreg lane width
SUB = 8      # vreg sublane count


def _round_up(n, m):
    return ((n + m - 1) // m) * m


def q_mlp_kernel(x_ref, w1_ref, b1_ref, w2t_ref, b2_ref, w3t_ref, b3_ref, o_ref):
    # ---- fc1 (batch on sublanes) -------------------------------------------
    # Tiny contraction dim (state_dim): keep it f32; bias added on the VPU in
    # f32 (no bf16 rounding of b1, VALU has plenty of slack).
    h1 = jnp.dot(x_ref[...], w1_ref[...], preferred_element_type=jnp.float32)
    h1 = jnp.maximum(h1 + b1_ref[...], 0.0)                    # (tb, hp) f32

    # ---- switch to batch-on-lanes ------------------------------------------
    # Single XLU transpose so the final output tile is (8, tb): lane-dense
    # unmasked stores and ~16x less output HBM traffic than (tb, 128) f32.
    h1_t = h1.T.astype(jnp.bfloat16)                           # (hp, tb) bf16

    # ---- fc2 (transposed weights, bf16 MXU, f32 accumulate) ----------------
    h2_t = jnp.dot(w2t_ref[...], h1_t, preferred_element_type=jnp.float32)
    h2_t = jnp.maximum(h2_t + b2_ref[...], 0.0)                # (hp, tb) f32

    # ---- fc3 (transposed) ---------------------------------------------------
    out_t = jnp.dot(w3t_ref[...], h2_t.astype(jnp.bfloat16),
                    preferred_element_type=jnp.float32) + b3_ref[...]
    o_ref[...] = out_t.astype(o_ref.dtype)                     # (ap, tb) store


def init_params(key, state_dim, action_dim, hidden_dim=50):
    """PyTorch nn.Linear-style init: uniform(-1/sqrt(fan_in), 1/sqrt(fan_in)).
    Weights stored as (in_dim, out_dim) (transpose of torch layout), bias (out,)."""
    ks = jax.random.split(key, 6)

    def linear(kw, kb, fan_in, fan_out):
        bound = float(fan_in) ** -0.5
        w = jax.random.uniform(kw, (fan_in, fan_out), jnp.float32, -bound, bound)
        b = jax.random.uniform(kb, (fan_out,), jnp.float32, -bound, bound)
        return w, b

    w1, b1 = linear(ks[0], ks[1], state_dim, hidden_dim)
    w2, b2 = linear(ks[2], ks[3], hidden_dim, hidden_dim)
    w3, b3 = linear(ks[4], ks[5], hidden_dim, action_dim)
    return dict(w1=w1, b1=b1, w2=w2, b2=b2, w3=w3, b3=b3)


def prepare_kernel_params(params, state_dim, action_dim, hidden_dim):
    """Pad hidden to 128 lanes; pad actions only to 8 SUBLANES (narrow output);
    store fc2/fc3 transposed (out, in) for the batch-on-lanes layout.
    Call once; reused across q_forward calls (amortizes the prep)."""
    hp = _round_up(hidden_dim, LANE)        # 50 -> 128 (keep 128; wider is a regression)
    ap = _round_up(action_dim, SUB)         # 2  -> 8  (sublane pad, NOT 128-lane pad)

    # fc1 kept f32 (precision-sensitive input path, negligible FLOPs).
    w1 = jnp.zeros((state_dim, hp), jnp.float32).at[:, :hidden_dim].set(params["w1"])
    b1 = jnp.zeros((1, hp), jnp.float32).at[0, :hidden_dim].set(params["b1"])

    # fc2/fc3 transposed, bf16 weights, f32 column biases.
    w2t = jnp.zeros((hp, hp), jnp.float32).at[:hidden_dim, :hidden_dim].set(params["w2"].T)
    b2 = jnp.zeros((hp, 1), jnp.float32).at[:hidden_dim, 0].set(params["b2"])
    w3t = jnp.zeros((ap, hp), jnp.float32).at[:action_dim, :hidden_dim].set(params["w3"].T)
    b3 = jnp.zeros((ap, 1), jnp.float32).at[:action_dim, 0].set(params["b3"])

    return dict(
        w1=w1, b1=b1,
        w2t=w2t.astype(jnp.bfloat16), b2=b2,
        w3t=w3t.astype(jnp.bfloat16), b3=b3,
        dims=(state_dim, action_dim, hp, ap),
    )


def _pick_tb(b_rows, tile_b):
    """Batch tile = lane dim of the output block: a multiple of 128, <= tile_b,
    and (when the batch allows it) chosen so the grid has >= 2 steps, giving
    v7x's two TensorCores work and enabling double-buffered pipelining."""
    tile_b = max(LANE, _round_up(tile_b, LANE))
    if b_rows <= LANE:
        return LANE
    n_tiles = max(pl.cdiv(b_rows, tile_b), 2)
    return _round_up(pl.cdiv(b_rows, n_tiles), LANE)


def q_forward(x, kparams, tile_b=4096):
    """x: (B, state_dim) float32 -> (B, action_dim) float32."""
    state_dim, action_dim, hp, ap = kparams["dims"]
    b_rows = x.shape[0]

    tb = _pick_tb(b_rows, tile_b)
    b_pad = _round_up(b_rows, tb)
    grid = (b_pad // tb,)

    x_in = x.astype(jnp.float32)
    if b_pad != b_rows:
        # Padded batch rows flow through as relu(bias)-derived garbage and are
        # discarded by the [:b_rows] slice below — never reduce over them.
        x_in = jnp.pad(x_in, ((0, b_pad - b_rows), (0, 0)))

    resident = lambda i: (0, 0)   # weights/biases DMA'd once, stay VMEM-resident
    # NOTE: for the tiny-batch RL loop the weight DMA + launch dominate; batch
    # more states per call (or keep weights resident across calls) to amortize.

    out_t = pl.pallas_call(
        q_mlp_kernel,
        out_shape=jax.ShapeDtypeStruct((ap, b_pad), jnp.float32),
        grid=grid,
        in_specs=[
            pl.BlockSpec((tb, state_dim), lambda i: (i, 0)),   # streamed activations
            pl.BlockSpec((state_dim, hp), resident),           # w1   (f32)
            pl.BlockSpec((1, hp), resident),                   # b1   (f32 row)
            pl.BlockSpec((hp, hp), resident),                  # w2^T (bf16)
            pl.BlockSpec((hp, 1), resident),                   # b2   (f32 column)
            pl.BlockSpec((ap, hp), resident),                  # w3^T (bf16)
            pl.BlockSpec((ap, 1), resident),                   # b3   (f32 column)
        ],
        out_specs=pl.BlockSpec((ap, tb), lambda i: (0, i)),    # batch on lanes
        compiler_params=pltpu.CompilerParams(
            dimension_semantics=("parallel",),                 # megacore-shard batch
            vmem_limit_bytes=32 * 1024 * 1024,                 # v7x-safe budget
        ),
    )(x_in, kparams["w1"], kparams["b1"], kparams["w2t"], kparams["b2"],
      kparams["w3t"], kparams["b3"])

    # (ap, b_pad) -> (B, action_dim): tiny slice + transpose in the wrapper.
    return out_t[:action_dim, :b_rows].T


def reference_forward(x, p):
    h1 = jnp.maximum(x @ p["w1"] + p["b1"], 0.0)
    h2 = jnp.maximum(h1 @ p["w2"] + p["b2"], 0.0)
    return h2 @ p["w3"] + p["b3"]


if __name__ == "__main__":
    key = jax.random.PRNGKey(0)
    k_x1, k_x2, k_p = jax.random.split(key, 3)

    state_dim, action_dim, hidden_dim = 4, 2, 50
    params = init_params(k_p, state_dim, action_dim, hidden_dim)
    kparams = prepare_kernel_params(params, state_dim, action_dim, hidden_dim)

    # Small RL-style batch (grid = 1) and a mid-size batch (grid = 2 tiles).
    for batch, k_x in ((8, k_x1), (300, k_x2)):
        x = jax.random.normal(k_x, (batch, state_dim), jnp.float32)
        out = q_forward(x, kparams)
        jax.block_until_ready(out)

        ref = reference_forward(x, params)
        assert out.shape == (batch, action_dim), out.shape
        # bf16 fc2/fc3 weights with f32 accumulation -> loosened tolerance.
        max_err = float(jnp.max(jnp.abs(out - ref)))
        assert max_err < 5e-2, f"mismatch vs reference (B={batch}): {max_err}"

    print("KERNEL_OK")
</pallas_src>

<mosaic_0001>
module attributes {stable_mosaic.version = 11 : i64} {
  func.func @q_mlp_kernel(%arg0: i32, %arg1: memref<128x4xf32, #tpu.memory_space<vmem>>, %arg2: memref<4x128xf32, #tpu.memory_space<vmem>>, %arg3: memref<1x128xf32, #tpu.memory_space<vmem>>, %arg4: memref<128x128xbf16, #tpu.memory_space<vmem>>, %arg5: memref<128x1xf32, #tpu.memory_space<vmem>>, %arg6: memref<8x128xbf16, #tpu.memory_space<vmem>>, %arg7: memref<8x1xf32, #tpu.memory_space<vmem>>, %arg8: memref<8x128xf32, #tpu.memory_space<vmem>>) attributes {dimension_semantics = [#tpu.dimension_semantics<parallel>], iteration_bounds = array<i64: 1>, scalar_prefetch = 0 : i64, scratch_operands = 0 : i64, tpu.core_type = #tpu.core_type<tc>, window_params = [{transform_indices = @transform_0, window_bounds = array<i64: 128, 4>}, {pipeline_mode = #tpu.pipeline_mode<synchronous>, transform_indices = @transform_1, window_bounds = array<i64: 4, 128>}, {pipeline_mode = #tpu.pipeline_mode<synchronous>, transform_indices = @transform_2, window_bounds = array<i64: 1, 128>}, {pipeline_mode = #tpu.pipeline_mode<synchronous>, transform_indices = @transform_3, window_bounds = array<i64: 128, 128>}, {pipeline_mode = #tpu.pipeline_mode<synchronous>, transform_indices = @transform_4, window_bounds = array<i64: 128, 1>}, {pipeline_mode = #tpu.pipeline_mode<synchronous>, transform_indices = @transform_5, window_bounds = array<i64: 8, 128>}, {pipeline_mode = #tpu.pipeline_mode<synchronous>, transform_indices = @transform_6, window_bounds = array<i64: 8, 1>}, {transform_indices = @transform_7, window_bounds = array<i64: 8, 128>}]} {
    %c0 = arith.constant 0 : index
    %c0_0 = arith.constant 0 : index
    %0 = vector.load %arg1[%c0, %c0_0] : memref<128x4xf32, #tpu.memory_space<vmem>>, vector<128x4xf32>
    %c0_1 = arith.constant 0 : index
    %c0_2 = arith.constant 0 : index
    %1 = vector.load %arg2[%c0_1, %c0_2] : memref<4x128xf32, #tpu.memory_space<vmem>>, vector<4x128xf32>
    %cst = arith.constant dense<0.000000e+00> : vector<128x128xf32>
    %2 = tpu.matmul %0, %1, %cst {dimension_numbers = #tpu.dot_dimension_numbers<[1], [0], [0], [1], [0, 0, 1, 1], [], []>} : vector<128x4xf32>, vector<4x128xf32>, vector<128x128xf32> -> vector<128x128xf32>
    %c0_3 = arith.constant 0 : index
    %c0_4 = arith.constant 0 : index
    %3 = vector.load %arg3[%c0_3, %c0_4] : memref<1x128xf32, #tpu.memory_space<vmem>>, vector<1x128xf32>
    %4 = vector.broadcast %3 : vector<1x128xf32> to vector<128x128xf32>
    %5 = arith.addf %2, %4 : vector<128x128xf32>
    %cst_5 = arith.constant 0.000000e+00 : f32
    %6 = vector.broadcast %cst_5 : f32 to vector<128x128xf32>
    %7 = arith.maximumf %5, %6 : vector<128x128xf32>
    %8 = tpu.transpose %7, [1, 0] : vector<128x128xf32> -> vector<128x128xf32>
    %9 = arith.truncf %8 : vector<128x128xf32> to vector<128x128xbf16>
    %c0_6 = arith.constant 0 : index
    %c0_7 = arith.constant 0 : index
    %10 = vector.load %arg4[%c0_6, %c0_7] : memref<128x128xbf16, #tpu.memory_space<vmem>>, vector<128x128xbf16>
    %cst_8 = arith.constant dense<0.000000e+00> : vector<128x128xf32>
    %11 = tpu.matmul %10, %9, %cst_8 {dimension_numbers = #tpu.dot_dimension_numbers<[1], [0], [0], [1], [0, 0, 1, 1], [], []>} : vector<128x128xbf16>, vector<128x128xbf16>, vector<128x128xf32> -> vector<128x128xf32>
    %c0_9 = arith.constant 0 : index
    %c0_10 = arith.constant 0 : index
    %12 = vector.load %arg5[%c0_9, %c0_10] : memref<128x1xf32, #tpu.memory_space<vmem>>, vector<128x1xf32>
    %13 = vector.broadcast %12 : vector<128x1xf32> to vector<128x128xf32>
    %14 = arith.addf %11, %13 : vector<128x128xf32>
    %cst_11 = arith.constant 0.000000e+00 : f32
    %15 = vector.broadcast %cst_11 : f32 to vector<128x128xf32>
    %16 = arith.maximumf %14, %15 : vector<128x128xf32>
    %c0_12 = arith.constant 0 : index
    %c0_13 = arith.constant 0 : index
    %17 = vector.load %arg6[%c0_12, %c0_13] : memref<8x128xbf16, #tpu.memory_space<vmem>>, vector<8x128xbf16>
    %18 = arith.truncf %16 : vector<128x128xf32> to vector<128x128xbf16>
    %cst_14 = arith.constant dense<0.000000e+00> : vector<8x128xf32>
    %19 = tpu.matmul %17, %18, %cst_14 {dimension_numbers = #tpu.dot_dimension_numbers<[1], [0], [0], [1], [0, 0, 1, 1], [], []>} : vector<8x128xbf16>, vector<128x128xbf16>, vector<8x128xf32> -> vector<8x128xf32>
    %c0_15 = arith.constant 0 : index
    %c0_16 = arith.constant 0 : index
    %20 = vector.load %arg7[%c0_15, %c0_16] : memref<8x1xf32, #tpu.memory_space<vmem>>, vector<8x1xf32>
    %21 = vector.broadcast %20 : vector<8x1xf32> to vector<8x128xf32>
    %22 = arith.addf %19, %21 : vector<8x128xf32>
    %c0_17 = arith.constant 0 : index
    %c0_18 = arith.constant 0 : index
    %23 = vector.load %arg8[%c0_17, %c0_18] : memref<8x128xf32, #tpu.memory_space<vmem>>, vector<8x128xf32>
    tpu.vector_store %arg8[%c0_17, %c0_18], %22 {strides = array<i32>} : memref<8x128xf32, #tpu.memory_space<vmem>>, vector<8x128xf32>,
    return
  }
  func.func @transform_0(%arg0: i32) -> (i32, i32) {
    %c0_i32 = arith.constant 0 : i32
    %c0_i32_0 = arith.constant 0 : i32
    return %arg0, %c0_i32 : i32, i32
  }
  func.func @transform_1(%arg0: i32) -> (i32, i32) {
    %c0_i32 = arith.constant 0 : i32
    %c0_i32_0 = arith.constant 0 : i32
    %c0_i32_1 = arith.constant 0 : i32
    return %c0_i32, %c0_i32_0 : i32, i32
  }
  func.func @transform_2(%arg0: i32) -> (i32, i32) {
    %c0_i32 = arith.constant 0 : i32
    %c0_i32_0 = arith.constant 0 : i32
    %c0_i32_1 = arith.constant 0 : i32
    return %c0_i32, %c0_i32_0 : i32, i32
  }
  func.func @transform_3(%arg0: i32) -> (i32, i32) {
    %c0_i32 = arith.constant 0 : i32
    %c0_i32_0 = arith.constant 0 : i32
    %c0_i32_1 = arith.constant 0 : i32
    return %c0_i32, %c0_i32_0 : i32, i32
  }
  func.func @transform_4(%arg0: i32) -> (i32, i32) {
    %c0_i32 = arith.constant 0 : i32
    %c0_i32_0 = arith.constant 0 : i32
    %c0_i32_1 = arith.constant 0 : i32
    return %c0_i32, %c0_i32_0 : i32, i32
  }
  func.func @transform_5(%arg0: i32) -> (i32, i32) {
    %c0_i32 = arith.constant 0 : i32
    %c0_i32_0 = arith.constant 0 : i32
    %c0_i32_1 = arith.constant 0 : i32
    return %c0_i32, %c0_i32_0 : i32, i32
  }
  func.func @transform_6(%arg0: i32) -> (i32, i32) {
    %c0_i32 = arith.constant 0 : i32
    %c0_i32_0 = arith.constant 0 : i32
    %c0_i32_1 = arith.constant 0 : i32
    return %c0_i32, %c0_i32_0 : i32, i32
  }
  func.func @transform_7(%arg0: i32) -> (i32, i32) {
    %c0_i32 = arith.constant 0 : i32
    %c0_i32_0 = arith.constant 0 : i32
    return %c0_i32, %arg0 : i32, i32
  }
}

</mosaic_0001>

<llo_original>
// kernel: tpu_custom_call.1
$region0: #{tpu_custom_call.1}
  #allocation0 [shape = 'u32[]', space=smem, size = 0x4, offset = 0x4, fixed_abs, tag = 'smem constant byte address 0x4 - core index']
  #allocation1 [shape = 'u32[144,128]{1,0:T(1,128)}', space=vmem, size = 0x12000, scoped, tag = 'internal scratch']
  %s0 = inlined_call_operand.vmem [shape: f32[128,4], index: 0, kind: input, shape index: {}]
  %s1 = inlined_call_operand.vmem [shape: f32[4,128], index: 1, kind: input, shape index: {}]
  %s2 = inlined_call_operand.vmem [shape: f32[1,128], index: 2, kind: input, shape index: {}]
  %s3 = inlined_call_operand.vmem [shape: bf16[128,128], index: 3, kind: input, shape index: {}]
  %s4 = inlined_call_operand.vmem [shape: f32[128,1], index: 4, kind: input, shape index: {}]
  %s5 = inlined_call_operand.vmem [shape: bf16[8,128], index: 5, kind: input, shape index: {}]
  %s6 = inlined_call_operand.vmem [shape: f32[8,1], index: 6, kind: input, shape index: {}]
  %s7 = inlined_call_operand.hbm [shape: f32[8,128], index: 7, kind: output, shape index: {}]
  %s8 = sld [smem:[#allocation0]]
  $region38: #{tpu_custom_call.1} parent=0
    _
  %s10 = ssub.s32 1, %s8
  %s11 = scalar_select 0, %s10, %s8
  $region1: #{tpu_custom_call.1} parent=0
    #allocation2 [shape = 'u8[4096]{0}', space=vmem, size = 0x1000, scoped, tag = 'output window, operand 0, single buffered']
    #allocation3 [shape = 's32[1]{0}', space=sflag, size = 0x4, scoped, tag = 'scoped memory for tpu_custom_call.1']
    %12 = vsyncpa [#allocation3], 0
    // Predicated region
    $region2: #{tpu_custom_call.1} parent=1 // pred_check
      _
    $region3: #{tpu_custom_call.1} parent=1 // pred_check_branch
      %14 = sbr.rel (0) target = $region5
    $region4: #{tpu_custom_call.1} parent=1 // pred_region
      _
    $region5: #{tpu_custom_call.1} parent=1 // pred_fallthru
      _
    // Predicated region
    $region6: #{tpu_custom_call.1} parent=1 // pred_check
      _
    $region7: #{tpu_custom_call.1} parent=1 // pred_check_branch
      %16 = sbr.rel (0) target = $region9
    $region8: #{tpu_custom_call.1} parent=1 // pred_region
      _
    $region9: #{tpu_custom_call.1} parent=1 // pred_fallthru
      _
    // Predicated region
    $region10: #{tpu_custom_call.1} parent=1 // pred_check
      _
    $region11: #{tpu_custom_call.1} parent=1 // pred_check_branch
      %18 = sbr.rel (0) target = $region13
    $region12: #{tpu_custom_call.1} parent=1 // pred_region
      _
    $region13: #{tpu_custom_call.1} parent=1 // pred_fallthru
      _
    // Predicated region
    $region14: #{tpu_custom_call.1} parent=1 // pred_check
      _
    $region15: #{tpu_custom_call.1} parent=1 // pred_check_branch
      %20 = sbr.rel (0) target = $region17
    $region16: #{tpu_custom_call.1} parent=1 // pred_region
      _
    $region17: #{tpu_custom_call.1} parent=1 // pred_fallthru
      _
    // Predicated region
    $region18: #{tpu_custom_call.1} parent=1 // pred_check
      _
    $region19: #{tpu_custom_call.1} parent=1 // pred_check_branch
      %22 = sbr.rel (0) target = $region21
    $region20: #{tpu_custom_call.1} parent=1 // pred_region
      _
    $region21: #{tpu_custom_call.1} parent=1 // pred_fallthru
      _
    // Predicated region
    $region22: #{tpu_custom_call.1} parent=1 // pred_check
      _
    $region23: #{tpu_custom_call.1} parent=1 // pred_check_branch
      %24 = sbr.rel (0) target = $region25
    $region24: #{tpu_custom_call.1} parent=1 // pred_region
      _
    $region25: #{tpu_custom_call.1} parent=1 // pred_fallthru
      _
    // Predicated region
    $region26: #{tpu_custom_call.1} parent=1 // pred_check
      _
    $region27: #{tpu_custom_call.1} parent=1 // pred_check_branch
      %26 = sbr.rel (0) target = $region29
    $region28: #{tpu_custom_call.1} parent=1 // pred_region
      _
    $region29: #{tpu_custom_call.1} parent=1 // pred_fallthru
      _
    %v28 = vld [vmem:[%s0] sm:$0xff]
    %v29 = vld [vmem:[%s0 + $0x8] sm:$0xff]
    %v30 = vld [vmem:[%s0 + $0x10] sm:$0xff]
    %v31 = vld [vmem:[%s0 + $0x18] sm:$0xff]
    %v32 = vld [vmem:[%s0 + $0x20] sm:$0xff]
    %v33 = vld [vmem:[%s0 + $0x28] sm:$0xff]
    %v34 = vld [vmem:[%s0 + $0x30] sm:$0xff]
    %v35 = vld [vmem:[%s0 + $0x38] sm:$0xff]
    %v36 = vld [vmem:[%s0 + $0x40] sm:$0xff]
    %v37 = vld [vmem:[%s0 + $0x48] sm:$0xff]
    %v38 = vld [vmem:[%s0 + $0x50] sm:$0xff]
    %v39 = vld [vmem:[%s0 + $0x58] sm:$0xff]
    %v40 = vld [vmem:[%s0 + $0x60] sm:$0xff]
    %v41 = vld [vmem:[%s0 + $0x68] sm:$0xff]
    %v42 = vld [vmem:[%s0 + $0x70] sm:$0xff]
    %v43 = vld [vmem:[%s0 + $0x78] sm:$0xff]
    %v44 = vld [vmem:[%s1] sm:$0xf]
    %v45 = vld [vmem:[%s2] sm:$0x1]
    %v47 = vlaneseq
    %v48 = vshrl.u32 %v47, 7
    %v49 = vsub.s32 0, %v48
    %v50 = vrot.slane %v45, %v49
    %vm52 = vcmask 31744
    %v54 = vsel %vm52, %v28, 0
    %v57 = vsel %vm52, %v29, 0
    %v60 = vsel %vm52, %v30, 0
    %v63 = vsel %vm52, %v31, 0
    %v66 = vsel %vm52, %v32, 0
    %v69 = vsel %vm52, %v33, 0
    %v72 = vsel %vm52, %v34, 0
    %v75 = vsel %vm52, %v35, 0
    %v78 = vsel %vm52, %v36, 0
    %v81 = vsel %vm52, %v37, 0
    %v84 = vsel %vm52, %v38, 0
    %v87 = vsel %vm52, %v39, 0
    %v90 = vsel %vm52, %v40, 0
    %v93 = vsel %vm52, %v41, 0
    %v96 = vsel %vm52, %v42, 0
    %v99 = vsel %vm52, %v43, 0
    %vm101 = vcmask 1043456
    %v103 = vsel %vm101, %v44, 0
    %105 = vmatprep.subr.mxu0 0.0
    %106 = vmatpush1.msra.mxu0 0.0
    %107 = vmatprep.subr.mxu0 0.0
    %108 = vmatpush1.msra.mxu0 0.0
    %109 = vmatprep.subr.mxu0 0.0
    %110 = vmatpush1.msra.mxu0 0.0
    %111 = vmatprep.subr.mxu0 0.0
    %112 = vmatpush1.msra.mxu0 0.0
    %113 = vmatprep.subr.mxu0 0.0
    %114 = vmatpush1.msra.mxu0 0.0
    %115 = vmatprep.subr.mxu0 0.0
    %116 = vmatpush1.msra.mxu0 0.0
    %117 = vmatprep.subr.mxu0 0.0
    %118 = vmatpush1.msra.mxu0 0.0
    %119 = vmatprep.subr.mxu0 0.0
    %120 = vmatpush1.msra.mxu0 0.0
    %121 = vmatprep.subr.mxu0 0.0
    %122 = vmatpush1.msra.mxu0 0.0
    %123 = vmatprep.subr.mxu0 0.0
    %124 = vmatpush1.msra.mxu0 0.0
    %125 = vmatprep.subr.mxu0 0.0
    %126 = vmatpush1.msra.mxu0 0.0
    %127 = vmatprep.subr.mxu0 0.0
    %128 = vmatpush1.msra.mxu0 0.0
    %129 = vmatprep.subr.mxu0 0.0
    %130 = vmatpush1.msra.mxu0 0.0
    %131 = vmatprep.subr.mxu0 0.0
    %132 = vmatpush1.msra.mxu0 0.0
    %133 = vmatprep.subr.mxu0 0.0
    %134 = vmatpush1.msra.mxu0 0.0
    %135 = vmatprep.subr.mxu0 0.0
    %136 = vmatpush1.msra.mxu0 %v103
    %137 = vmatprep.subr.mxu0 0.0
    %138 = vmatpush2.msra.mxu0 0.0
    %139 = vmatprep.subr.mxu0 0.0
    %140 = vmatpush2.msra.mxu0 0.0
    %141 = vmatprep.subr.mxu0 0.0
    %142 = vmatpush2.msra.mxu0 0.0
    %143 = vmatprep.subr.mxu0 0.0
    %144 = vmatpush2.msra.mxu0 0.0
    %145 = vmatprep.subr.mxu0 0.0
    %146 = vmatpush2.msra.mxu0 0.0
    %147 = vmatprep.subr.mxu0 0.0
    %148 = vmatpush2.msra.mxu0 0.0
    %149 = vmatprep.subr.mxu0 0.0
    %150 = vmatpush2.msra.mxu0 0.0
    %151 = vmatprep.subr.mxu0 0.0
    %152 = vmatpush2.msra.mxu0 0.0
    %153 = vmatprep.subr.mxu0 0.0
    %154 = vmatpush2.msra.mxu0 0.0
    %155 = vmatprep.subr.mxu0 0.0
    %156 = vmatpush2.msra.mxu0 0.0
    %157 = vmatprep.subr.mxu0 0.0
    %158 = vmatpush2.msra.mxu0 0.0
    %159 = vmatprep.subr.mxu0 0.0
    %160 = vmatpush2.msra.mxu0 0.0
    %161 = vmatprep.subr.mxu0 0.0
    %162 = vmatpush2.msra.mxu0 0.0
    %163 = vmatprep.subr.mxu0 0.0
    %164 = vmatpush2.msra.mxu0 0.0
    %165 = vmatprep.subr.mxu0 0.0
    %166 = vmatpush2.msra.mxu0 0.0
    %167 = vmatprep.subr.mxu0 0.0
    %168 = vmatpush2.msra.mxu0 0.0
    %169 = vmatprep.mubr.f32.mxu0 0.0
    %170 = vmatmul.mubr.f32.gmra.mxu0 %v54
    %v171 = vpop.f32.mrf.mxu0
    %v172 = vadd.f32 %v50, %v171
    %v173 = vpop.f32.mrf.mxu0
    %174 = vmatprep.mubr.f32.mxu0 0.0
    %175 = vmatmul.mubr.f32.gmra.mxu0 %v57
    %v176 = vpop.f32.mrf.mxu0
    %v177 = vadd.f32 %v50, %v176
    %v178 = vpop.f32.mrf.mxu0
    %179 = vmatprep.mubr.f32.mxu0 0.0
    %180 = vmatmul.mubr.f32.gmra.mxu0 %v60
    %v181 = vpop.f32.mrf.mxu0
    %v182 = vadd.f32 %v50, %v181
    %v183 = vpop.f32.mrf.mxu0
    %184 = vmatprep.mubr.f32.mxu0 0.0
    %185 = vmatmul.mubr.f32.gmra.mxu0 %v63
    %v186 = vpop.f32.mrf.mxu0
    %v187 = vadd.f32 %v50, %v186
    %v188 = vpop.f32.mrf.mxu0
    %189 = vmatprep.mubr.f32.mxu0 0.0
    %190 = vmatmul.mubr.f32.gmra.mxu0 %v66
    %v191 = vpop.f32.mrf.mxu0
    %v192 = vadd.f32 %v50, %v191
    %v193 = vpop.f32.mrf.mxu0
    %194 = vmatprep.mubr.f32.mxu0 0.0
    %195 = vmatmul.mubr.f32.gmra.mxu0 %v69
    %v196 = vpop.f32.mrf.mxu0
    %v197 = vadd.f32 %v50, %v196
    %v198 = vpop.f32.mrf.mxu0
    %199 = vmatprep.mubr.f32.mxu0 0.0
    %200 = vmatmul.mubr.f32.gmra.mxu0 %v72
    %v201 = vpop.f32.mrf.mxu0
    %v202 = vadd.f32 %v50, %v201
    %v203 = vpop.f32.mrf.mxu0
    %204 = vmatprep.mubr.f32.mxu0 0.0
    %205 = vmatmul.mubr.f32.gmra.mxu0 %v75
    %v206 = vpop.f32.mrf.mxu0
    %v207 = vadd.f32 %v50, %v206
    %v208 = vpop.f32.mrf.mxu0
    %209 = vmatprep.mubr.f32.mxu0 0.0
    %210 = vmatmul.mubr.f32.gmra.mxu0 %v78
    %v211 = vpop.f32.mrf.mxu0
    %v212 = vadd.f32 %v50, %v211
    %v213 = vpop.f32.mrf.mxu0
    %214 = vmatprep.mubr.f32.mxu0 0.0
    %215 = vmatmul.mubr.f32.gmra.mxu0 %v81
    %v216 = vpop.f32.mrf.mxu0
    %v217 = vadd.f32 %v50, %v216
    %v218 = vpop.f32.mrf.mxu0
    %219 = vmatprep.mubr.f32.mxu0 0.0
    %220 = vmatmul.mubr.f32.gmra.mxu0 %v84
    %v221 = vpop.f32.mrf.mxu0
    %v222 = vadd.f32 %v50, %v221
    %v223 = vpop.f32.mrf.mxu0
    %224 = vmatprep.mubr.f32.mxu0 0.0
    %225 = vmatmul.mubr.f32.gmra.mxu0 %v87
    %v226 = vpop.f32.mrf.mxu0
    %v227 = vadd.f32 %v50, %v226
    %v228 = vpop.f32.mrf.mxu0
    %229 = vmatprep.mubr.f32.mxu0 0.0
    %230 = vmatmul.mubr.f32.gmra.mxu0 %v90
    %v231 = vpop.f32.mrf.mxu0
    %v232 = vadd.f32 %v50, %v231
    %v233 = vpop.f32.mrf.mxu0
    %234 = vmatprep.mubr.f32.mxu0 0.0
    %235 = vmatmul.mubr.f32.gmra.mxu0 %v93
    %v236 = vpop.f32.mrf.mxu0
    %v237 = vadd.f32 %v50, %v236
    %v238 = vpop.f32.mrf.mxu0
    %239 = vmatprep.mubr.f32.mxu0 0.0
    %240 = vmatmul.mubr.f32.gmra.mxu0 %v96
    %v241 = vpop.f32.mrf.mxu0
    %v242 = vadd.f32 %v50, %v241
    %v243 = vpop.f32.mrf.mxu0
    %244 = vmatprep.mubr.f32.mxu0 0.0
    %245 = vmatmul.mubr.f32.gmra.mxu0 %v99
    %v246 = vpop.f32.mrf.mxu0
    %v247 = vadd.f32 %v50, %v246
    %v248 = vpop.f32.mrf.mxu0
    %249 = vdwg.mxu0
    %v250 = vmax.f32 %v172, 0.0
    %v251 = vmax.f32 %v177, 0.0
    %v252 = vmax.f32 %v182, 0.0
    %v253 = vmax.f32 %v187, 0.0
    %v254 = vmax.f32 %v192, 0.0
    %v255 = vmax.f32 %v197, 0.0
    %v256 = vmax.f32 %v202, 0.0
    %v257 = vmax.f32 %v207, 0.0
    %v258 = vmax.f32 %v212, 0.0
    %v259 = vmax.f32 %v217, 0.0
    %v260 = vmax.f32 %v222, 0.0
    %v261 = vmax.f32 %v227, 0.0
    %v262 = vmax.f32 %v232, 0.0
    %v263 = vmax.f32 %v237, 0.0
    %v264 = vmax.f32 %v242, 0.0
    %v265 = vmax.f32 %v247, 0.0
    %266 = vxpose.xlu0.b32.start [1/16] %v250, 128
    %267 = vxpose.xlu0.b32.cont [2/16] %v251, 128
    %268 = vxpose.xlu0.b32.cont [3/16] %v252, 128
    %269 = vxpose.xlu0.b32.cont [4/16] %v253, 128
    %270 = vxpose.xlu0.b32.cont [5/16] %v254, 128
    %271 = vxpose.xlu0.b32.cont [6/16] %v255, 128
    %272 = vxpose.xlu0.b32.cont [7/16] %v256, 128
    %273 = vxpose.xlu0.b32.cont [8/16] %v257, 128
    %274 = vxpose.xlu0.b32.cont [9/16] %v258, 128
    %275 = vxpose.xlu0.b32.cont [10/16] %v259, 128
    %276 = vxpose.xlu0.b32.cont [11/16] %v260, 128
    %277 = vxpose.xlu0.b32.cont [12/16] %v261, 128
    %278 = vxpose.xlu0.b32.cont [13/16] %v262, 128
    %279 = vxpose.xlu0.b32.cont [14/16] %v263, 128
    %280 = vxpose.xlu0.b32.cont [15/16] %v264, 128
    %281 = vxpose.xlu0.b32.end [16/16] %v265, 128
    %v282 = vpop.trf.xlu0
    %v283 = vpop.trf.xlu0
    %v284 = vpop.trf.xlu0
    %v285 = vpop.trf.xlu0
    %v286 = vpop.trf.xlu0
    %v287 = vpop.trf.xlu0
    %v288 = vpop.trf.xlu0
    %v289 = vpop.trf.xlu0
    %v290 = vpop.trf.xlu0
    %v291 = vpop.trf.xlu0
    %v292 = vpop.trf.xlu0
    %v293 = vpop.trf.xlu0
    %v294 = vpop.trf.xlu0
    %v295 = vpop.trf.xlu0
    %v296 = vpop.trf.xlu0
    %v297 = vpop.trf.xlu0
    %v298 = vpack.c.bf16 %v283, %v282
    %v299 = vpack.c.bf16 %v285, %v284
    %v300 = vpack.c.bf16 %v287, %v286
    %v301 = vpack.c.bf16 %v289, %v288
    %v302 = vpack.c.bf16 %v291, %v290
    %v303 = vpack.c.bf16 %v293, %v292
    %v304 = vpack.c.bf16 %v295, %v294
    %v305 = vpack.c.bf16 %v297, %v296
    %v306 = vld [vmem:[%s3] sm:$0xf]
    %v307 = vld [vmem:[%s3 + $0x4] sm:$0xf]
    %v308 = vld [vmem:[%s3 + $0x8] sm:$0xf]
    %v309 = vld [vmem:[%s3 + $0xc] sm:$0xf]
    %v310 = vld [vmem:[%s3 + $0x10] sm:$0xf]
    %v311 = vld [vmem:[%s3 + $0x14] sm:$0xf]
    %v312 = vld [vmem:[%s3 + $0x18] sm:$0xf]
    %v313 = vld [vmem:[%s3 + $0x1c] sm:$0xf]
    %v314 = vld [vmem:[%s3 + $0x20] sm:$0xf]
    %v315 = vld [vmem:[%s3 + $0x24] sm:$0xf]
    %v316 = vld [vmem:[%s3 + $0x28] sm:$0xf]
    %v317 = vld [vmem:[%s3 + $0x2c] sm:$0xf]
    %v318 = vld [vmem:[%s3 + $0x30] sm:$0xf]
    %v319 = vld [vmem:[%s3 + $0x34] sm:$0xf]
    %v320 = vld [vmem:[%s3 + $0x38] sm:$0xf]
    %v321 = vld [vmem:[%s3 + $0x3c] sm:$0xf]
    %v322 = vld [vmem:[%s4] sm:$0xff]
    %v323 = vld [vmem:[%s4 + $0x8] sm:$0xff]
    %v324 = vld [vmem:[%s4 + $0x10] sm:$0xff]
    %v325 = vld [vmem:[%s4 + $0x18] sm:$0xff]
    %v326 = vld [vmem:[%s4 + $0x20] sm:$0xff]
    %v327 = vld [vmem:[%s4 + $0x28] sm:$0xff]
    %v328 = vld [vmem:[%s4 + $0x30] sm:$0xff]
    %v329 = vld [vmem:[%s4 + $0x38] sm:$0xff]
    %v330 = vld [vmem:[%s4 + $0x40] sm:$0xff]
    %v331 = vld [vmem:[%s4 + $0x48] sm:$0xff]
    %v332 = vld [vmem:[%s4 + $0x50] sm:$0xff]
    %v333 = vld [vmem:[%s4 + $0x58] sm:$0xff]
    %v334 = vld [vmem:[%s4 + $0x60] sm:$0xff]
    %v335 = vld [vmem:[%s4 + $0x68] sm:$0xff]
    %v336 = vld [vmem:[%s4 + $0x70] sm:$0xff]
    %v337 = vld [vmem:[%s4 + $0x78] sm:$0xff]
    %339 = vset.pattern.permute.xlu0 0
    %340 = vperm.xlu0 %339, %v322
    %v341 = vpop.permute.xlu0 %340
    %344 = vset.pattern.permute.xlu0 0
    %345 = vperm.xlu0 %344, %v323
    %v346 = vpop.permute.xlu0 %345
    %349 = vset.pattern.permute.xlu0 0
    %350 = vperm.xlu0 %349, %v324
    %v351 = vpop.permute.xlu0 %350
    %354 = vset.pattern.permute.xlu0 0
    %355 = vperm.xlu0 %354, %v325
    %v356 = vpop.permute.xlu0 %355
    %359 = vset.pattern.permute.xlu0 0
    %360 = vperm.xlu0 %359, %v326
    %v361 = vpop.permute.xlu0 %360
    %364 = vset.pattern.permute.xlu0 0
    %365 = vperm.xlu0 %364, %v327
    %v366 = vpop.permute.xlu0 %365
    %369 = vset.pattern.permute.xlu0 0
    %370 = vperm.xlu0 %369, %v328
    %v371 = vpop.permute.xlu0 %370
    %374 = vset.pattern.permute.xlu0 0
    %375 = vperm.xlu0 %374, %v329
    %v376 = vpop.permute.xlu0 %375
    %379 = vset.pattern.permute.xlu0 0
    %380 = vperm.xlu0 %379, %v330
    %v381 = vpop.permute.xlu0 %380
    %384 = vset.pattern.permute.xlu0 0
    %385 = vperm.xlu0 %384, %v331
    %v386 = vpop.permute.xlu0 %385
    %389 = vset.pattern.permute.xlu0 0
    %390 = vperm.xlu0 %389, %v332
    %v391 = vpop.permute.xlu0 %390
    %394 = vset.pattern.permute.xlu0 0
    %395 = vperm.xlu0 %394, %v333
    %v396 = vpop.permute.xlu0 %395
    %399 = vset.pattern.permute.xlu0 0
    %400 = vperm.xlu0 %399, %v334
    %v401 = vpop.permute.xlu0 %400
    %404 = vset.pattern.permute.xlu0 0
    %405 = vperm.xlu0 %404, %v335
    %v406 = vpop.permute.xlu0 %405
    %409 = vset.pattern.permute.xlu0 0
    %410 = vperm.xlu0 %409, %v336
    %v411 = vpop.permute.xlu0 %410
    %414 = vset.pattern.permute.xlu0 0
    %415 = vperm.xlu0 %414, %v337
    %v416 = vpop.permute.xlu0 %415
    %v434 = vunpack.c.l.b16 %v306
    %v435 = vunpack.c.l.b16 %v307
    %v436 = vunpack.c.l.b16 %v308
    %v437 = vunpack.c.l.b16 %v309
    %v438 = vunpack.c.l.b16 %v310
    %v439 = vunpack.c.l.b16 %v311
    %v440 = vunpack.c.l.b16 %v312
    %v441 = vunpack.c.l.b16 %v313
    %v442 = vunpack.c.l.b16 %v314
    %v443 = vunpack.c.l.b16 %v315
    %v444 = vunpack.c.l.b16 %v316
    %v445 = vunpack.c.l.b16 %v317
    %v446 = vunpack.c.l.b16 %v318
    %v447 = vunpack.c.l.b16 %v319
    %v448 = vunpack.c.l.b16 %v320
    %v449 = vunpack.c.l.b16 %v321
    %v450 = vpack.c.b16 %v435, %v434
    %v451 = vpack.c.b16 %v437, %v436
    %v452 = vpack.c.b16 %v439, %v438
    %v453 = vpack.c.b16 %v441, %v440
    %v454 = vpack.c.b16 %v443, %v442
    %v455 = vpack.c.b16 %v445, %v444
    %v456 = vpack.c.b16 %v447, %v446
    %v457 = vpack.c.b16 %v449, %v448
    %466 = vmatprep.subr.bf16.mxu0 0
    %467 = vmatpush1.bf16.msra.mxu0 %v305
    %468 = vmatprep.subr.bf16.mxu0 0
    %469 = vmatpush1.bf16.msra.mxu0 %v304
    %470 = vmatprep.subr.bf16.mxu0 0
    %471 = vmatpush1.bf16.msra.mxu0 %v303
    %472 = vmatprep.subr.bf16.mxu0 0
    %473 = vmatpush1.bf16.msra.mxu0 %v302
    %474 = vmatprep.subr.bf16.mxu0 0
    %475 = vmatpush1.bf16.msra.mxu0 %v301
    %476 = vmatprep.subr.bf16.mxu0 0
    %477 = vmatpush1.bf16.msra.mxu0 %v300
    %478 = vmatprep.subr.bf16.mxu0 0
    %479 = vmatpush1.bf16.msra.mxu0 %v299
    %480 = vmatprep.subr.bf16.mxu0 0
    %481 = vmatpush1.bf16.msra.mxu0 %v298
    %482 = vmatprep.subr.bf16.mxu0 0
    %483 = vmatpush2.bf16.msra.mxu0 0
    %484 = vmatprep.subr.bf16.mxu0 0
    %485 = vmatpush2.bf16.msra.mxu0 0
    %486 = vmatprep.subr.bf16.mxu0 0
    %487 = vmatpush2.bf16.msra.mxu0 0
    %488 = vmatprep.subr.bf16.mxu0 0
    %489 = vmatpush2.bf16.msra.mxu0 0
    %490 = vmatprep.subr.bf16.mxu0 0
    %491 = vmatpush2.bf16.msra.mxu0 0
    %492 = vmatprep.subr.bf16.mxu0 0
    %493 = vmatpush2.bf16.msra.mxu0 0
    %494 = vmatprep.subr.bf16.mxu0 0
    %495 = vmatpush2.bf16.msra.mxu0 0
    %496 = vmatprep.subr.bf16.mxu0 0
    %497 = vmatpush2.bf16.msra.mxu0 0
    %498 = vmatprep.mubr.bf16.mxu0 0
    %499 = vmatmul.mubr.bf16.gmra.mxu0 %v450
    %v500 = vpop.f32.mrf.mxu0
    %v501 = vadd.f32 %v341, %v500
    %v502 = vpop.f32.mrf.mxu0
    %v503 = vpop.f32.mrf.mxu0
    %v504 = vadd.f32 %v346, %v503
    %v505 = vpop.f32.mrf.mxu0
    %506 = vmatprep.mubr.bf16.mxu0 0
    %507 = vmatmul.mubr.bf16.gmra.mxu0 %v451
    %v508 = vpop.f32.mrf.mxu0
    %v509 = vadd.f32 %v351, %v508
    %v510 = vpop.f32.mrf.mxu0
    %v511 = vpop.f32.mrf.mxu0
    %v512 = vadd.f32 %v356, %v511
    %v513 = vpop.f32.mrf.mxu0
    %514 = vmatprep.mubr.bf16.mxu0 0
    %515 = vmatmul.mubr.bf16.gmra.mxu0 %v452
    %v516 = vpop.f32.mrf.mxu0
    %v517 = vadd.f32 %v361, %v516
    %v518 = vpop.f32.mrf.mxu0
    %v519 = vpop.f32.mrf.mxu0
    %v520 = vadd.f32 %v366, %v519
    %v521 = vpop.f32.mrf.mxu0
    %522 = vmatprep.mubr.bf16.mxu0 0
    %523 = vmatmul.mubr.bf16.gmra.mxu0 %v453
    %v524 = vpop.f32.mrf.mxu0
    %v525 = vadd.f32 %v371, %v524
    %v526 = vpop.f32.mrf.mxu0
    %v527 = vpop.f32.mrf.mxu0
    %v528 = vadd.f32 %v376, %v527
    %v529 = vpop.f32.mrf.mxu0
    %530 = vmatprep.mubr.bf16.mxu0 0
    %531 = vmatmul.mubr.bf16.gmra.mxu0 %v454
    %v532 = vpop.f32.mrf.mxu0
    %v533 = vadd.f32 %v381, %v532
    %v534 = vpop.f32.mrf.mxu0
    %v535 = vpop.f32.mrf.mxu0
    %v536 = vadd.f32 %v386, %v535
    %v537 = vpop.f32.mrf.mxu0
    %538 = vmatprep.mubr.bf16.mxu0 0
    %539 = vmatmul.mubr.bf16.gmra.mxu0 %v455
    %v540 = vpop.f32.mrf.mxu0
    %v541 = vadd.f32 %v391, %v540
    %v542 = vpop.f32.mrf.mxu0
    %v543 = vpop.f32.mrf.mxu0
    %v544 = vadd.f32 %v396, %v543
    %v545 = vpop.f32.mrf.mxu0
    %546 = vmatprep.mubr.bf16.mxu0 0
    %547 = vmatmul.mubr.bf16.gmra.mxu0 %v456
    %v548 = vpop.f32.mrf.mxu0
    %v549 = vadd.f32 %v401, %v548
    %v550 = vpop.f32.mrf.mxu0
    %v551 = vpop.f32.mrf.mxu0
    %v552 = vadd.f32 %v406, %v551
    %v553 = vpop.f32.mrf.mxu0
    %554 = vmatprep.mubr.bf16.mxu0 0
    %555 = vmatmul.mubr.bf16.gmra.mxu0 %v457
    %v556 = vpop.f32.mrf.mxu0
    %v557 = vadd.f32 %v411, %v556
    %v558 = vpop.f32.mrf.mxu0
    %v559 = vpop.f32.mrf.mxu0
    %v560 = vadd.f32 %v416, %v559
    %v561 = vpop.f32.mrf.mxu0
    %562 = vdwg.mxu0
    %v563 = vmax.f32 %v501, 0.0
    %v564 = vmax.f32 %v504, 0.0
    %v565 = vmax.f32 %v509, 0.0
    %v566 = vmax.f32 %v512, 0.0
    %v567 = vmax.f32 %v517, 0.0
    %v568 = vmax.f32 %v520, 0.0
    %v569 = vmax.f32 %v525, 0.0
    %v570 = vmax.f32 %v528, 0.0
    %v571 = vmax.f32 %v533, 0.0
    %v572 = vmax.f32 %v536, 0.0
    %v573 = vmax.f32 %v541, 0.0
    %v574 = vmax.f32 %v544, 0.0
    %v575 = vmax.f32 %v549, 0.0
    %v576 = vmax.f32 %v552, 0.0
    %v577 = vmax.f32 %v557, 0.0
    %v578 = vmax.f32 %v560, 0.0
    %v579 = vld [vmem:[%s5] sm:$0xf]
    %v580 = vpack.c.bf16 %v564, %v563
    %v581 = vpack.c.bf16 %v566, %v565
    %v582 = vpack.c.bf16 %v568, %v567
    %v583 = vpack.c.bf16 %v570, %v569
    %v584 = vpack.c.bf16 %v572, %v571
    %v585 = vpack.c.bf16 %v574, %v573
    %v586 = vpack.c.bf16 %v576, %v575
    %v587 = vpack.c.bf16 %v578, %v577
    %v588 = vld [vmem:[%s6] sm:$0xff]
    %590 = vset.pattern.permute.xlu0 0
    %591 = vperm.xlu0 %590, %v588
    %v592 = vpop.permute.xlu0 %591
    %594 = vmatprep.subr.bf16.mxu0 0
    %595 = vmatpush1.bf16.msra.mxu0 %v587
    %596 = vmatprep.subr.bf16.mxu0 0
    %597 = vmatpush1.bf16.msra.mxu0 %v586
    %598 = vmatprep.subr.bf16.mxu0 0
    %599 = vmatpush1.bf16.msra.mxu0 %v585
    %600 = vmatprep.subr.bf16.mxu0 0
    %601 = vmatpush1.bf16.msra.mxu0 %v584
    %602 = vmatprep.subr.bf16.mxu0 0
    %603 = vmatpush1.bf16.msra.mxu0 %v583
    %604 = vmatprep.subr.bf16.mxu0 0
    %605 = vmatpush1.bf16.msra.mxu0 %v582
    %606 = vmatprep.subr.bf16.mxu0 0
    %607 = vmatpush1.bf16.msra.mxu0 %v581
    %608 = vmatprep.subr.bf16.mxu0 0
    %609 = vmatpush1.bf16.msra.mxu0 %v580
    %610 = vmatprep.subr.bf16.mxu0 0
    %611 = vmatpush2.bf16.msra.mxu0 0
    %612 = vmatprep.subr.bf16.mxu0 0
    %613 = vmatpush2.bf16.msra.mxu0 0
    %614 = vmatprep.subr.bf16.mxu0 0
    %615 = vmatpush2.bf16.msra.mxu0 0
    %616 = vmatprep.subr.bf16.mxu0 0
    %617 = vmatpush2.bf16.msra.mxu0 0
    %618 = vmatprep.subr.bf16.mxu0 0
    %619 = vmatpush2.bf16.msra.mxu0 0
    %620 = vmatprep.subr.bf16.mxu0 0
    %621 = vmatpush2.bf16.msra.mxu0 0
    %622 = vmatprep.subr.bf16.mxu0 0
    %623 = vmatpush2.bf16.msra.mxu0 0
    %624 = vmatprep.subr.bf16.mxu0 0
    %625 = vmatpush2.bf16.msra.mxu0 0
    %626 = vmatprep.mubr.bf16.mxu0 0
    %627 = vmatmul.mubr.bf16.gmra.mxu0 %v579
    %v628 = vpop.f32.mrf.mxu0
    %v629 = vadd.f32 %v592, %v628
    %v630 = vpop.f32.mrf.mxu0
    %v631 = vpop.f32.mrf.mxu0
    %v632 = vpop.f32.mrf.mxu0
    %633 = vdwg.mxu0
    %634 = vst [vmem:[#allocation2] sm:$0xff] %v629
    // Predicated region
    $region30: #{tpu_custom_call.1} parent=1 // pred_check
      _
    $region31: #{tpu_custom_call.1} parent=1 // pred_check_branch
      %636 = sbr.rel (0) target = $region33
    $region32: #{tpu_custom_call.1} parent=1 // pred_region
      %s638 = ssub.s32 128, 128
      %639 = vsyncadd [#allocation3], %s638
      %s641 = sshll.u32 [#allocation2], 4
      %s642 = int_to_ptr.vmem [resolvable:$true] %s641
      %644 = dma.vmem_to_hbm [thread:$0]  %s642, 128, %s7, [#allocation3]
    $region33: #{tpu_custom_call.1} parent=1 // pred_fallthru
      _
    // Predicated region
    $region34: #{tpu_custom_call.1} parent=1 // pred_check
      _
    $region35: #{tpu_custom_call.1} parent=1 // pred_check_branch
      %646 = sbr.rel (0) target = $region37
    $region36: #{tpu_custom_call.1} parent=1 // pred_region
      %647 = dma.done [#allocation3], 128
    $region37: #{tpu_custom_call.1} parent=1 // pred_fallthru
      _
    %648 = vsyncpa [#allocation3], 1

</llo_original>
